<compile_context>
chip_gen: v7x
topology: tpu7x:2x2x1
jax: 0.10.0
libtpu: 0.0.40
codegen_flags: <defaults>
</compile_context>

<pallas_src>
from typing import Tuple

import jax
import jax.numpy as jnp
from jax.experimental import pallas as pl
from jax.experimental.pallas import tpu as pltpu


def _round_up(a: int, b: int) -> int:
    return ((a + b - 1) // b) * b


def _fused_embed_kernel(idx_ref, w_ref, out_ref):
    """One batch tile of the fused multi-field embedding lookup.

    idx_ref: (TB, F) int32, VMEM — indices already offset into fused-table rows
             (out-of-range / padded rows carry the sentinel K, which matches no
             iota value and therefore yields a zero output row).
    w_ref:   (K, total_pad) float32, VMEM — block-diagonal fused table.
    out_ref: (TB, total_pad) float32, VMEM — lane-dense output tile.
    """
    idx = idx_ref[...]                                    # (TB, F)
    tb, nf = idx.shape
    kdim = w_ref.shape[0]

    # Multi-hot mask: fields occupy disjoint row ranges of the fused table, so
    # OR over per-field compares is exactly the stacked one-hots.
    iota = jax.lax.broadcasted_iota(jnp.int32, (tb, kdim), 1)
    hit = iota == idx[:, 0:1]
    for f in range(1, nf):                                # static unroll, F is tiny
        hit = hit | (iota == idx[:, f:f + 1])
    mhot = hit.astype(jnp.float32)                        # (TB, K)

    # Single MXU matmul -> lane-dense (TB, total_pad); one unmasked store.
    out_ref[...] = jnp.dot(
        mhot,
        w_ref[...],
        preferred_element_type=jnp.float32,
        precision=jax.lax.Precision.HIGHEST,              # bit-exact gather-as-matmul
    )


def features_embedding_forward(x: jax.Array,
                               w_fused: jax.Array,
                               row_offsets: jax.Array,
                               field_dims: jax.Array,
                               total: int) -> jax.Array:
    """x: (B, F) int -> (B, 1, total) float32."""
    batch, num_fields = x.shape
    kdim, total_pad = int(w_fused.shape[0]), int(w_fused.shape[1])

    # Pre-offset indices into fused-table rows; out-of-range -> sentinel kdim
    # (never matches the iota -> zero embedding row, like the previous kernel).
    xi = x.astype(jnp.int32)
    valid = (xi >= 0) & (xi < field_dims[None, :])
    xi_off = jnp.where(valid, xi + row_offsets[None, :], kdim)

    # Batch tile: multiple of 8 sublanes, capped at 512 rows; cdiv(B, 2) keeps
    # the grid at >= 2 steps for mid-size batches so both v7x TCs split work.
    tb = max(8, min(512, _round_up(pl.cdiv(batch, 2), 8)))
    b_pad = _round_up(batch, tb)
    if b_pad != batch:
        # Padded rows get the sentinel (zero row) and are sliced off below.
        xi_off = jnp.pad(xi_off, ((0, b_pad - batch), (0, 0)),
                         constant_values=kdim)

    grid = (b_pad // tb,)

    # VMEM budget: default double-buffering on every operand is accounted for
    # (the grid-invariant fused table is fetched once but still 2x-allocated).
    out_tile_bytes = tb * total_pad * 4
    idx_tile_bytes = tb * num_fields * 4
    table_bytes = kdim * total_pad * 4
    vmem_bytes = 2 * (out_tile_bytes + idx_tile_bytes + table_bytes) + (4 << 20)
    vmem_bytes = max(vmem_bytes, 16 << 20)                # generous headroom

    cost = pl.CostEstimate(
        flops=2 * b_pad * kdim * total_pad,
        transcendentals=0,
        bytes_accessed=b_pad * num_fields * 4 + table_bytes + b_pad * total_pad * 4,
    )

    out = pl.pallas_call(
        _fused_embed_kernel,
        out_shape=jax.ShapeDtypeStruct((b_pad, total_pad), jnp.float32),
        grid=grid,
        in_specs=[
            pl.BlockSpec((tb, num_fields), lambda i: (i, 0)),        # indices
            pl.BlockSpec((kdim, total_pad), lambda i: (0, 0)),       # fused table
        ],
        out_specs=pl.BlockSpec((tb, total_pad), lambda i: (i, 0)),
        compiler_params=pltpu.CompilerParams(
            dimension_semantics=("parallel",),             # megacore on v7x
            vmem_limit_bytes=int(vmem_bytes),
        ),
        cost_estimate=cost,
    )(xi_off, w_fused)

    # Skip the slab re-slice entirely when no padding was introduced.
    if b_pad == batch and total_pad == total:
        return out[:, None, :]
    return out[:batch, :total][:, None, :]


class FeaturesEmbedding:
    """JAX/Pallas port of the PyTorch FeaturesEmbedding module."""

    def __init__(self, field_dims_with_embedding_dims: Tuple, key: jax.Array):
        dims = tuple((int(fd), int(ed)) for fd, ed in field_dims_with_embedding_dims)
        self.field_dims_with_embedding_dims = dims

        # Per-field tables (kept for reference/inspection), xavier_uniform_ init.
        self.tables = []
        for field_dim, embed_dim in dims:
            key, sub = jax.random.split(key)
            bound = (6.0 / (field_dim + embed_dim)) ** 0.5
            self.tables.append(
                jax.random.uniform(sub, (field_dim, embed_dim), jnp.float32,
                                   minval=-bound, maxval=bound))

        field_dims = [fd for fd, _ in dims]
        embed_dims = [ed for _, ed in dims]
        self.total = sum(embed_dims)

        # Block-diagonal fused table, built once: rows = stacked vocab ranges
        # (rounded to 8 sublanes), cols = concatenated embed dims padded to a
        # lane-dense multiple of 128.
        kdim = _round_up(sum(field_dims), 8)
        total_pad = _round_up(self.total, 128)
        w = jnp.zeros((kdim, total_pad), jnp.float32)
        row_offs = []
        r = c = 0
        for (fd, ed), t in zip(dims, self.tables):
            w = w.at[r:r + fd, c:c + ed].set(t)
            row_offs.append(r)
            r += fd
            c += ed
        self.w_fused = w
        self.row_offsets = jnp.asarray(row_offs, jnp.int32)
        self.field_dims = jnp.asarray(field_dims, jnp.int32)

        # TODO(synk): guard for large vocabs — beyond a few MiB of fused table,
        #             switch to the HBM-resident DMA row-gather path.

    def __call__(self, x: jax.Array) -> jax.Array:
        # NOTE: out-of-range indices yield a zero embedding row rather than an
        # error (torch.nn.Embedding would raise).
        return features_embedding_forward(
            x, self.w_fused, self.row_offsets, self.field_dims, self.total)


def _reference(module: FeaturesEmbedding, x: jax.Array) -> jax.Array:
    outs = []
    for i, table in enumerate(module.tables):
        outs.append(jnp.take(table, x[:, i], axis=0)[:, None, :])
    return jnp.concatenate(outs, axis=2)


if __name__ == "__main__":
    key = jax.random.PRNGKey(0)
    key, init_key, idx_key = jax.random.split(key, 3)

    # Small, heterogeneous field/embedding dims consistent with the module.
    field_dims_with_embedding_dims = ((10, 8), (7, 16), (5, 4))
    batch = 2

    module = FeaturesEmbedding(field_dims_with_embedding_dims, init_key)

    # Build x: (batch, num_fields) int32, each column within its field's range.
    cols = []
    for field_dim, _ in field_dims_with_embedding_dims:
        idx_key, sub = jax.random.split(idx_key)
        cols.append(jax.random.randint(sub, (batch, 1), 0, field_dim, dtype=jnp.int32))
    x = jnp.concatenate(cols, axis=1)                     # (2, 3) int32

    out = jax.block_until_ready(module(x))

    total_dim = sum(e for _, e in field_dims_with_embedding_dims)
    assert out.shape == (batch, 1, total_dim), out.shape
    assert out.dtype == jnp.float32

    ref = jax.block_until_ready(_reference(module, x))
    assert jnp.allclose(out, ref, atol=1e-6), "mismatch vs pure-JAX reference"

    print("KERNEL_OK")
</pallas_src>

<mosaic_0001>
module attributes {stable_mosaic.version = 11 : i64} {
  func.func @_fused_embed_kernel(%arg0: i32, %arg1: memref<8x3xi32, #tpu.memory_space<vmem>>, %arg2: memref<24x128xf32, #tpu.memory_space<vmem>>, %arg3: memref<8x128xf32, #tpu.memory_space<vmem>>) attributes {dimension_semantics = [#tpu.dimension_semantics<parallel>], iteration_bounds = array<i64: 1>, scalar_prefetch = 0 : i64, scratch_operands = 0 : i64, tpu.core_type = #tpu.core_type<tc>, window_params = [{transform_indices = @transform_0, window_bounds = array<i64: 8, 3>}, {pipeline_mode = #tpu.pipeline_mode<synchronous>, transform_indices = @transform_1, window_bounds = array<i64: 24, 128>}, {transform_indices = @transform_2, window_bounds = array<i64: 8, 128>}]} {
    %c0 = arith.constant 0 : index
    %c0_0 = arith.constant 0 : index
    %0 = vector.load %arg1[%c0, %c0_0] : memref<8x3xi32, #tpu.memory_space<vmem>>, vector<8x3xi32>
    %1 = tpu.iota {dimensions = array<i32: 1>} : vector<8x24xi32>
    %2 = vector.extract_strided_slice %0 {offsets = [0, 0], sizes = [8, 1], strides = [1, 1]} : vector<8x3xi32> to vector<8x1xi32>
    %3 = vector.broadcast %2 : vector<8x1xi32> to vector<8x24xi32>
    %4 = arith.cmpi eq, %1, %3 : vector<8x24xi32>
    %5 = vector.extract_strided_slice %0 {offsets = [0, 1], sizes = [8, 1], strides = [1, 1]} : vector<8x3xi32> to vector<8x1xi32>
    %6 = vector.broadcast %5 : vector<8x1xi32> to vector<8x24xi32>
    %7 = arith.cmpi eq, %1, %6 : vector<8x24xi32>
    %8 = arith.ori %4, %7 : vector<8x24xi1>
    %9 = vector.extract_strided_slice %0 {offsets = [0, 2], sizes = [8, 1], strides = [1, 1]} : vector<8x3xi32> to vector<8x1xi32>
    %10 = vector.broadcast %9 : vector<8x1xi32> to vector<8x24xi32>
    %11 = arith.cmpi eq, %1, %10 : vector<8x24xi32>
    %12 = arith.ori %8, %11 : vector<8x24xi1>
    %13 = arith.extui %12 : vector<8x24xi1> to vector<8x24xi32>
    %14 = arith.sitofp %13 : vector<8x24xi32> to vector<8x24xf32>
    %c0_1 = arith.constant 0 : index
    %c0_2 = arith.constant 0 : index
    %15 = vector.load %arg2[%c0_1, %c0_2] : memref<24x128xf32, #tpu.memory_space<vmem>>, vector<24x128xf32>
    %cst = arith.constant dense<0.000000e+00> : vector<8x128xf32>
    %16 = tpu.matmul %14, %15, %cst {dimension_numbers = #tpu.dot_dimension_numbers<[1], [0], [0], [1], [0, 0, 1, 1], [], []>, precision = #tpu.contract_precision<fp32>} : vector<8x24xf32>, vector<24x128xf32>, vector<8x128xf32> -> vector<8x128xf32>
    %c0_3 = arith.constant 0 : index
    %c0_4 = arith.constant 0 : index
    %17 = vector.load %arg3[%c0_3, %c0_4] : memref<8x128xf32, #tpu.memory_space<vmem>>, vector<8x128xf32>
    tpu.vector_store %arg3[%c0_3, %c0_4], %16 {strides = array<i32>} : memref<8x128xf32, #tpu.memory_space<vmem>>, vector<8x128xf32>,
    return
  }
  func.func @transform_0(%arg0: i32) -> (i32, i32) {
    %c0_i32 = arith.constant 0 : i32
    %c0_i32_0 = arith.constant 0 : i32
    return %arg0, %c0_i32 : i32, i32
  }
  func.func @transform_1(%arg0: i32) -> (i32, i32) {
    %c0_i32 = arith.constant 0 : i32
    %c0_i32_0 = arith.constant 0 : i32
    %c0_i32_1 = arith.constant 0 : i32
    return %c0_i32, %c0_i32_0 : i32, i32
  }
  func.func @transform_2(%arg0: i32) -> (i32, i32) {
    %c0_i32 = arith.constant 0 : i32
    %c0_i32_0 = arith.constant 0 : i32
    return %arg0, %c0_i32 : i32, i32
  }
}

</mosaic_0001>

<llo_original>
// kernel: tpu_custom_call.1
$region0: #{tpu_custom_call.1}
  #allocation0 [shape = 'u32[]', space=smem, size = 0x4, offset = 0x4, fixed_abs, tag = 'smem constant byte address 0x4 - core index']
  #allocation1 [shape = 'u32[144,128]{1,0:T(1,128)}', space=vmem, size = 0x12000, scoped, tag = 'internal scratch']
  %s0 = inlined_call_operand.vmem [shape: s32[8,3], index: 0, kind: input, shape index: {}]
  %s1 = inlined_call_operand.hbm [shape: f32[24,128], index: 1, kind: input, shape index: {}]
  %s2 = inlined_call_operand.hbm [shape: f32[8,128], index: 2, kind: output, shape index: {}]
  %s3 = sld [smem:[#allocation0]]
  $region22: #{tpu_custom_call.1} parent=0
    _
  %s5 = ssub.s32 1, %s3
  %s6 = scalar_select 0, %s5, %s3
  $region1: #{tpu_custom_call.1} parent=0
    #allocation2 [shape = 'u8[12288]{0}', space=vmem, size = 0x3000, scoped, tag = 'input window, operand 1, single buffered']
    #allocation3 [shape = 's32[1]{0}', space=sflag, size = 0x4, scoped, tag = 'scoped memory for tpu_custom_call.1']
    #allocation4 [shape = 's32[1]{0}', space=sflag, size = 0x4, scoped, tag = 'scoped memory for tpu_custom_call.1']
    #allocation5 [shape = 'u8[4096]{0}', space=vmem, size = 0x1000, scoped, tag = 'output window, operand 0, single buffered']
    %7 = vsyncpa [#allocation3], 0
    %8 = vsyncpa [#allocation4], 0
    // Predicated region
    $region2: #{tpu_custom_call.1} parent=1 // pred_check
      _
    $region3: #{tpu_custom_call.1} parent=1 // pred_check_branch
      %10 = sbr.rel (0) target = $region5
    $region4: #{tpu_custom_call.1} parent=1 // pred_region
      _
    $region5: #{tpu_custom_call.1} parent=1 // pred_fallthru
      _
    // Predicated region
    $region6: #{tpu_custom_call.1} parent=1 // pred_check
      _
    $region7: #{tpu_custom_call.1} parent=1 // pred_check_branch
      %12 = sbr.rel (0) target = $region9
    $region8: #{tpu_custom_call.1} parent=1 // pred_region
      %s14 = ssub.s32 384, 384
      %15 = vsyncadd [#allocation3], %s14
      %s16 = sshll.u32 [#allocation2], 4
      %s17 = int_to_ptr.vmem [resolvable:$true] %s16
      %22 = dma.hbm_to_vmem [thread:$0]  %s1, 384, %s17, [#allocation3], 128, 128, 8
    $region9: #{tpu_custom_call.1} parent=1 // pred_fallthru
      _
    // Predicated region
    $region10: #{tpu_custom_call.1} parent=1 // pred_check
      _
    $region11: #{tpu_custom_call.1} parent=1 // pred_check_branch
      %24 = sbr.rel (0) target = $region13
    $region12: #{tpu_custom_call.1} parent=1 // pred_region
      %25 = dma.done [#allocation3], 384
    $region13: #{tpu_custom_call.1} parent=1 // pred_fallthru
      _
    %v26 = vld [vmem:[%s0] sm:$0xff]
    %v27 = vlaneseq
    %v28 = vand.u32 %v27, 127
    %29 = vset.pattern.permute.xlu0 0
    %30 = vperm.xlu0 %29, %v26
    %v31 = vpop.permute.xlu0 %30
    %vm32 = vcmp.eq.s32.totalorder %v28, %v31
    %33 = vset.pattern.permute.xlu0 1
    %34 = vperm.xlu0 %33, %v26
    %v35 = vpop.permute.xlu0 %34
    %vm36 = vcmp.eq.s32.totalorder %v28, %v35
    %vm37 = vmor %vm32, %vm36
    %38 = vset.pattern.permute.xlu0 2
    %39 = vperm.xlu0 %38, %v26
    %v40 = vpop.permute.xlu0 %39
    %vm41 = vcmp.eq.s32.totalorder %v28, %v40
    %vm42 = vmor %vm37, %vm41
    %v43 = vsel %vm42, 1, 0
    %v44 = vcvt.s32.f32 %v43
    %v45 = vld [vmem:[#allocation2] sm:$0xff]
    %v46 = vld [vmem:[#allocation2 + $0x8] sm:$0xff]
    %v47 = vld [vmem:[#allocation2 + $0x10] sm:$0xff]
    %vm48 = vcmask 195584
    %v50 = vsel %vm48, %v44, 0
    %52 = vmatprep.subr.mxu0 0.0
    %v53 = vand.u32 %v45, 4294901760
    %54 = vmatpush1.msra.mxu0 %v53
    %55 = vmatprep.subr.mxu0 0.0
    %v56 = vand.u32 %v46, 4294901760
    %57 = vmatpush1.msra.mxu0 %v56
    %58 = vmatprep.subr.mxu0 0.0
    %v59 = vand.u32 %v47, 4294901760
    %60 = vmatpush1.msra.mxu0 %v59
    %61 = vmatprep.subr.mxu0 0.0
    %62 = vmatpush1.msra.mxu0 0.0
    %63 = vmatprep.subr.mxu0 0.0
    %64 = vmatpush1.msra.mxu0 0.0
    %65 = vmatprep.subr.mxu0 0.0
    %66 = vmatpush1.msra.mxu0 0.0
    %67 = vmatprep.subr.mxu0 0.0
    %68 = vmatpush1.msra.mxu0 0.0
    %69 = vmatprep.subr.mxu0 0.0
    %70 = vmatpush1.msra.mxu0 0.0
    %71 = vmatprep.subr.mxu0 0.0
    %72 = vmatpush1.msra.mxu0 0.0
    %73 = vmatprep.subr.mxu0 0.0
    %74 = vmatpush1.msra.mxu0 0.0
    %75 = vmatprep.subr.mxu0 0.0
    %76 = vmatpush1.msra.mxu0 0.0
    %77 = vmatprep.subr.mxu0 0.0
    %78 = vmatpush1.msra.mxu0 0.0
    %79 = vmatprep.subr.mxu0 0.0
    %80 = vmatpush1.msra.mxu0 0.0
    %81 = vmatprep.subr.mxu0 0.0
    %82 = vmatpush1.msra.mxu0 0.0
    %83 = vmatprep.subr.mxu0 0.0
    %84 = vmatpush1.msra.mxu0 0.0
    %85 = vmatprep.subr.mxu0 0.0
    %86 = vmatpush1.msra.mxu0 0.0
    %87 = vmatprep.subr.mxu0 0.0
    %88 = vmatpush1.msra.mxu0 0.0
    %89 = vmatprep.subr.mxu0 0.0
    %90 = vmatpush1.msra.mxu0 0.0
    %91 = vmatprep.subr.mxu0 0.0
    %92 = vmatpush1.msra.mxu0 0.0
    %93 = vmatprep.subr.mxu0 0.0
    %94 = vmatpush1.msra.mxu0 0.0
    %95 = vmatprep.subr.mxu0 0.0
    %96 = vmatpush1.msra.mxu0 0.0
    %97 = vmatprep.subr.mxu0 0.0
    %98 = vmatpush1.msra.mxu0 0.0
    %99 = vmatprep.subr.mxu0 0.0
    %100 = vmatpush1.msra.mxu0 0.0
    %101 = vmatprep.subr.mxu0 0.0
    %102 = vmatpush1.msra.mxu0 0.0
    %103 = vmatprep.subr.mxu0 0.0
    %104 = vmatpush1.msra.mxu0 0.0
    %105 = vmatprep.subr.mxu0 0.0
    %106 = vmatpush1.msra.mxu0 0.0
    %107 = vmatprep.subr.mxu0 0.0
    %108 = vmatpush1.msra.mxu0 0.0
    %109 = vmatprep.subr.mxu0 0.0
    %110 = vmatpush1.msra.mxu0 0.0
    %111 = vmatprep.subr.mxu0 0.0
    %112 = vmatpush1.msra.mxu0 0.0
    %113 = vmatprep.subr.mxu0 0.0
    %114 = vmatpush1.msra.mxu0 0.0
    %115 = vmatprep.subr.mxu0 0.0
    %116 = vmatpush1.msra.mxu0 0.0
    %117 = vmatprep.subr.mxu0 0.0
    %118 = vmatpush1.msra.mxu0 0.0
    %119 = vmatprep.mubr.f32.mxu0 0.0
    %v120 = vand.u32 %v50, 4294901760
    %v121 = vsub.f32 %v50, %v120
    %v122 = vand.u32 %v121, 4294901760
    %v123 = vsub.f32 %v121, %v122
    %v124 = vand.u32 %v123, 4294901760
    %125 = vmatmul.mubr.f32.gmra.mrb[0].mxu0 %v124
    %v126 = vpop.f32.mrb[0].mxu0
    %v127 = vadd.f32 0.0, %v126
    %v128 = vpop.f32.mrb[0].mxu0
    %129 = vdwg.mxu0
    %130 = vmatprep.subr.mxu0 0.0
    %v131 = vand.u32 %v45, 4294901760
    %v132 = vsub.f32 %v45, %v131
    %v133 = vand.u32 %v132, 4294901760
    %v134 = vsub.f32 %v132, %v133
    %v135 = vand.u32 %v134, 4294901760
    %136 = vmatpush1.msra.mxu0 %v135
    %137 = vmatprep.subr.mxu0 0.0
    %v138 = vand.u32 %v46, 4294901760
    %v139 = vsub.f32 %v46, %v138
    %v140 = vand.u32 %v139, 4294901760
    %v141 = vsub.f32 %v139, %v140
    %v142 = vand.u32 %v141, 4294901760
    %143 = vmatpush1.msra.mxu0 %v142
    %144 = vmatprep.subr.mxu0 0.0
    %v145 = vand.u32 %v47, 4294901760
    %v146 = vsub.f32 %v47, %v145
    %v147 = vand.u32 %v146, 4294901760
    %v148 = vsub.f32 %v146, %v147
    %v149 = vand.u32 %v148, 4294901760
    %150 = vmatpush1.msra.mxu0 %v149
    %151 = vmatprep.subr.mxu0 0.0
    %152 = vmatpush1.msra.mxu0 0.0
    %153 = vmatprep.subr.mxu0 0.0
    %154 = vmatpush1.msra.mxu0 0.0
    %155 = vmatprep.subr.mxu0 0.0
    %156 = vmatpush1.msra.mxu0 0.0
    %157 = vmatprep.subr.mxu0 0.0
    %158 = vmatpush1.msra.mxu0 0.0
    %159 = vmatprep.subr.mxu0 0.0
    %160 = vmatpush1.msra.mxu0 0.0
    %161 = vmatprep.subr.mxu0 0.0
    %162 = vmatpush1.msra.mxu0 0.0
    %163 = vmatprep.subr.mxu0 0.0
    %164 = vmatpush1.msra.mxu0 0.0
    %165 = vmatprep.subr.mxu0 0.0
    %166 = vmatpush1.msra.mxu0 0.0
    %167 = vmatprep.subr.mxu0 0.0
    %168 = vmatpush1.msra.mxu0 0.0
    %169 = vmatprep.subr.mxu0 0.0
    %170 = vmatpush1.msra.mxu0 0.0
    %171 = vmatprep.subr.mxu0 0.0
    %172 = vmatpush1.msra.mxu0 0.0
    %173 = vmatprep.subr.mxu0 0.0
    %174 = vmatpush1.msra.mxu0 0.0
    %175 = vmatprep.subr.mxu0 0.0
    %176 = vmatpush1.msra.mxu0 0.0
    %177 = vmatprep.subr.mxu0 0.0
    %178 = vmatpush1.msra.mxu0 0.0
    %179 = vmatprep.subr.mxu0 0.0
    %180 = vmatpush1.msra.mxu0 0.0
    %181 = vmatprep.subr.mxu0 0.0
    %182 = vmatpush1.msra.mxu0 0.0
    %183 = vmatprep.subr.mxu0 0.0
    %184 = vmatpush1.msra.mxu0 0.0
    %185 = vmatprep.subr.mxu0 0.0
    %186 = vmatpush1.msra.mxu0 0.0
    %187 = vmatprep.subr.mxu0 0.0
    %188 = vmatpush1.msra.mxu0 0.0
    %189 = vmatprep.subr.mxu0 0.0
    %190 = vmatpush1.msra.mxu0 0.0
    %191 = vmatprep.subr.mxu0 0.0
    %192 = vmatpush1.msra.mxu0 0.0
    %193 = vmatprep.subr.mxu0 0.0
    %194 = vmatpush1.msra.mxu0 0.0
    %195 = vmatprep.subr.mxu0 0.0
    %196 = vmatpush1.msra.mxu0 0.0
    %197 = vmatprep.subr.mxu0 0.0
    %198 = vmatpush1.msra.mxu0 0.0
    %199 = vmatprep.subr.mxu0 0.0
    %200 = vmatpush1.msra.mxu0 0.0
    %201 = vmatprep.subr.mxu0 0.0
    %202 = vmatpush1.msra.mxu0 0.0
    %203 = vmatprep.subr.mxu0 0.0
    %204 = vmatpush1.msra.mxu0 0.0
    %205 = vmatprep.subr.mxu0 0.0
    %206 = vmatpush1.msra.mxu0 0.0
    %207 = vmatprep.subr.mxu0 0.0
    %208 = vmatpush1.msra.mxu0 0.0
    %209 = vmatprep.mubr.f32.mxu0 0.0
    %v210 = vand.u32 %v50, 4294901760
    %211 = vmatmul.mubr.f32.gmra.mrb[0].mxu0 %v210
    %v212 = vpop.f32.mrb[0].mxu0
    %v213 = vadd.f32 %v127, %v212
    %v214 = vpop.f32.mrb[0].mxu0
    %215 = vdwg.mxu0
    %216 = vmatprep.subr.mxu0 0.0
    %v217 = vand.u32 %v45, 4294901760
    %v218 = vsub.f32 %v45, %v217
    %219 = vmatpush1.msra.mxu0 %v218
    %220 = vmatprep.subr.mxu0 0.0
    %v221 = vand.u32 %v46, 4294901760
    %v222 = vsub.f32 %v46, %v221
    %223 = vmatpush1.msra.mxu0 %v222
    %224 = vmatprep.subr.mxu0 0.0
    %v225 = vand.u32 %v47, 4294901760
    %v226 = vsub.f32 %v47, %v225
    %227 = vmatpush1.msra.mxu0 %v226
    %228 = vmatprep.subr.mxu0 0.0
    %229 = vmatpush1.msra.mxu0 0.0
    %230 = vmatprep.subr.mxu0 0.0
    %231 = vmatpush1.msra.mxu0 0.0
    %232 = vmatprep.subr.mxu0 0.0
    %233 = vmatpush1.msra.mxu0 0.0
    %234 = vmatprep.subr.mxu0 0.0
    %235 = vmatpush1.msra.mxu0 0.0
    %236 = vmatprep.subr.mxu0 0.0
    %237 = vmatpush1.msra.mxu0 0.0
    %238 = vmatprep.subr.mxu0 0.0
    %239 = vmatpush1.msra.mxu0 0.0
    %240 = vmatprep.subr.mxu0 0.0
    %241 = vmatpush1.msra.mxu0 0.0
    %242 = vmatprep.subr.mxu0 0.0
    %243 = vmatpush1.msra.mxu0 0.0
    %244 = vmatprep.subr.mxu0 0.0
    %245 = vmatpush1.msra.mxu0 0.0
    %246 = vmatprep.subr.mxu0 0.0
    %247 = vmatpush1.msra.mxu0 0.0
    %248 = vmatprep.subr.mxu0 0.0
    %249 = vmatpush1.msra.mxu0 0.0
    %250 = vmatprep.subr.mxu0 0.0
    %251 = vmatpush1.msra.mxu0 0.0
    %252 = vmatprep.subr.mxu0 0.0
    %253 = vmatpush1.msra.mxu0 0.0
    %254 = vmatprep.subr.mxu0 0.0
    %255 = vmatpush1.msra.mxu0 0.0
    %256 = vmatprep.subr.mxu0 0.0
    %257 = vmatpush1.msra.mxu0 0.0
    %258 = vmatprep.subr.mxu0 0.0
    %259 = vmatpush1.msra.mxu0 0.0
    %260 = vmatprep.subr.mxu0 0.0
    %261 = vmatpush1.msra.mxu0 0.0
    %262 = vmatprep.subr.mxu0 0.0
    %263 = vmatpush1.msra.mxu0 0.0
    %264 = vmatprep.subr.mxu0 0.0
    %265 = vmatpush1.msra.mxu0 0.0
    %266 = vmatprep.subr.mxu0 0.0
    %267 = vmatpush1.msra.mxu0 0.0
    %268 = vmatprep.subr.mxu0 0.0
    %269 = vmatpush1.msra.mxu0 0.0
    %270 = vmatprep.subr.mxu0 0.0
    %271 = vmatpush1.msra.mxu0 0.0
    %272 = vmatprep.subr.mxu0 0.0
    %273 = vmatpush1.msra.mxu0 0.0
    %274 = vmatprep.subr.mxu0 0.0
    %275 = vmatpush1.msra.mxu0 0.0
    %276 = vmatprep.subr.mxu0 0.0
    %277 = vmatpush1.msra.mxu0 0.0
    %278 = vmatprep.subr.mxu0 0.0
    %279 = vmatpush1.msra.mxu0 0.0
    %280 = vmatprep.subr.mxu0 0.0
    %281 = vmatpush1.msra.mxu0 0.0
    %282 = vmatprep.subr.mxu0 0.0
    %283 = vmatpush1.msra.mxu0 0.0
    %284 = vmatprep.subr.mxu0 0.0
    %285 = vmatpush1.msra.mxu0 0.0
    %286 = vmatprep.mubr.f32.mxu0 0.0
    %v287 = vand.u32 %v50, 4294901760
    %v288 = vsub.f32 %v50, %v287
    %289 = vmatmul.mubr.f32.gmra.mrb[0].mxu0 %v288
    %v290 = vpop.f32.mrb[0].mxu0
    %v291 = vadd.f32 %v213, %v290
    %v292 = vpop.f32.mrb[0].mxu0
    %293 = vdwg.mxu0
    %294 = vmatprep.subr.mxu0 0.0
    %v295 = vand.u32 %v45, 4294901760
    %296 = vmatpush1.msra.mxu0 %v295
    %297 = vmatprep.subr.mxu0 0.0
    %v298 = vand.u32 %v46, 4294901760
    %299 = vmatpush1.msra.mxu0 %v298
    %300 = vmatprep.subr.mxu0 0.0
    %v301 = vand.u32 %v47, 4294901760
    %302 = vmatpush1.msra.mxu0 %v301
    %303 = vmatprep.subr.mxu0 0.0
    %304 = vmatpush1.msra.mxu0 0.0
    %305 = vmatprep.subr.mxu0 0.0
    %306 = vmatpush1.msra.mxu0 0.0
    %307 = vmatprep.subr.mxu0 0.0
    %308 = vmatpush1.msra.mxu0 0.0
    %309 = vmatprep.subr.mxu0 0.0
    %310 = vmatpush1.msra.mxu0 0.0
    %311 = vmatprep.subr.mxu0 0.0
    %312 = vmatpush1.msra.mxu0 0.0
    %313 = vmatprep.subr.mxu0 0.0
    %314 = vmatpush1.msra.mxu0 0.0
    %315 = vmatprep.subr.mxu0 0.0
    %316 = vmatpush1.msra.mxu0 0.0
    %317 = vmatprep.subr.mxu0 0.0
    %318 = vmatpush1.msra.mxu0 0.0
    %319 = vmatprep.subr.mxu0 0.0
    %320 = vmatpush1.msra.mxu0 0.0
    %321 = vmatprep.subr.mxu0 0.0
    %322 = vmatpush1.msra.mxu0 0.0
    %323 = vmatprep.subr.mxu0 0.0
    %324 = vmatpush1.msra.mxu0 0.0
    %325 = vmatprep.subr.mxu0 0.0
    %326 = vmatpush1.msra.mxu0 0.0
    %327 = vmatprep.subr.mxu0 0.0
    %328 = vmatpush1.msra.mxu0 0.0
    %329 = vmatprep.subr.mxu0 0.0
    %330 = vmatpush1.msra.mxu0 0.0
    %331 = vmatprep.subr.mxu0 0.0
    %332 = vmatpush1.msra.mxu0 0.0
    %333 = vmatprep.subr.mxu0 0.0
    %334 = vmatpush1.msra.mxu0 0.0
    %335 = vmatprep.subr.mxu0 0.0
    %336 = vmatpush1.msra.mxu0 0.0
    %337 = vmatprep.subr.mxu0 0.0
    %338 = vmatpush1.msra.mxu0 0.0
    %339 = vmatprep.subr.mxu0 0.0
    %340 = vmatpush1.msra.mxu0 0.0
    %341 = vmatprep.subr.mxu0 0.0
    %342 = vmatpush1.msra.mxu0 0.0
    %343 = vmatprep.subr.mxu0 0.0
    %344 = vmatpush1.msra.mxu0 0.0
    %345 = vmatprep.subr.mxu0 0.0
    %346 = vmatpush1.msra.mxu0 0.0
    %347 = vmatprep.subr.mxu0 0.0
    %348 = vmatpush1.msra.mxu0 0.0
    %349 = vmatprep.subr.mxu0 0.0
    %350 = vmatpush1.msra.mxu0 0.0
    %351 = vmatprep.subr.mxu0 0.0
    %352 = vmatpush1.msra.mxu0 0.0
    %353 = vmatprep.subr.mxu0 0.0
    %354 = vmatpush1.msra.mxu0 0.0
    %355 = vmatprep.subr.mxu0 0.0
    %356 = vmatpush1.msra.mxu0 0.0
    %357 = vmatprep.subr.mxu0 0.0
    %358 = vmatpush1.msra.mxu0 0.0
    %359 = vmatprep.subr.mxu0 0.0
    %360 = vmatpush1.msra.mxu0 0.0
    %361 = vmatprep.mubr.f32.mxu0 0.0
    %v362 = vand.u32 %v50, 4294901760
    %v363 = vsub.f32 %v50, %v362
    %v364 = vand.u32 %v363, 4294901760
    %365 = vmatmul.mubr.f32.gmra.mrb[0].mxu0 %v364
    %v366 = vpop.f32.mrb[0].mxu0
    %v367 = vadd.f32 %v291, %v366
    %v368 = vpop.f32.mrb[0].mxu0
    %369 = vdwg.mxu0
    %370 = vmatprep.subr.mxu0 0.0
    %v371 = vand.u32 %v45, 4294901760
    %v372 = vsub.f32 %v45, %v371
    %v373 = vand.u32 %v372, 4294901760
    %374 = vmatpush1.msra.mxu0 %v373
    %375 = vmatprep.subr.mxu0 0.0
    %v376 = vand.u32 %v46, 4294901760
    %v377 = vsub.f32 %v46, %v376
    %v378 = vand.u32 %v377, 4294901760
    %379 = vmatpush1.msra.mxu0 %v378
    %380 = vmatprep.subr.mxu0 0.0
    %v381 = vand.u32 %v47, 4294901760
    %v382 = vsub.f32 %v47, %v381
    %v383 = vand.u32 %v382, 4294901760
    %384 = vmatpush1.msra.mxu0 %v383
    %385 = vmatprep.subr.mxu0 0.0
    %386 = vmatpush1.msra.mxu0 0.0
    %387 = vmatprep.subr.mxu0 0.0
    %388 = vmatpush1.msra.mxu0 0.0
    %389 = vmatprep.subr.mxu0 0.0
    %390 = vmatpush1.msra.mxu0 0.0
    %391 = vmatprep.subr.mxu0 0.0
    %392 = vmatpush1.msra.mxu0 0.0
    %393 = vmatprep.subr.mxu0 0.0
    %394 = vmatpush1.msra.mxu0 0.0
    %395 = vmatprep.subr.mxu0 0.0
    %396 = vmatpush1.msra.mxu0 0.0
    %397 = vmatprep.subr.mxu0 0.0
    %398 = vmatpush1.msra.mxu0 0.0
    %399 = vmatprep.subr.mxu0 0.0
    %400 = vmatpush1.msra.mxu0 0.0
    %401 = vmatprep.subr.mxu0 0.0
    %402 = vmatpush1.msra.mxu0 0.0
    %403 = vmatprep.subr.mxu0 0.0
    %404 = vmatpush1.msra.mxu0 0.0
    %405 = vmatprep.subr.mxu0 0.0
    %406 = vmatpush1.msra.mxu0 0.0
    %407 = vmatprep.subr.mxu0 0.0
    %408 = vmatpush1.msra.mxu0 0.0
    %409 = vmatprep.subr.mxu0 0.0
    %410 = vmatpush1.msra.mxu0 0.0
    %411 = vmatprep.subr.mxu0 0.0
    %412 = vmatpush1.msra.mxu0 0.0
    %413 = vmatprep.subr.mxu0 0.0
    %414 = vmatpush1.msra.mxu0 0.0
    %415 = vmatprep.subr.mxu0 0.0
    %416 = vmatpush1.msra.mxu0 0.0
    %417 = vmatprep.subr.mxu0 0.0
    %418 = vmatpush1.msra.mxu0 0.0
    %419 = vmatprep.subr.mxu0 0.0
    %420 = vmatpush1.msra.mxu0 0.0
    %421 = vmatprep.subr.mxu0 0.0
    %422 = vmatpush1.msra.mxu0 0.0
    %423 = vmatprep.subr.mxu0 0.0
    %424 = vmatpush1.msra.mxu0 0.0
    %425 = vmatprep.subr.mxu0 0.0
    %426 = vmatpush1.msra.mxu0 0.0
    %427 = vmatprep.subr.mxu0 0.0
    %428 = vmatpush1.msra.mxu0 0.0
    %429 = vmatprep.subr.mxu0 0.0
    %430 = vmatpush1.msra.mxu0 0.0
    %431 = vmatprep.subr.mxu0 0.0
    %432 = vmatpush1.msra.mxu0 0.0
    %433 = vmatprep.subr.mxu0 0.0
    %434 = vmatpush1.msra.mxu0 0.0
    %435 = vmatprep.subr.mxu0 0.0
    %436 = vmatpush1.msra.mxu0 0.0
    %437 = vmatprep.subr.mxu0 0.0
    %438 = vmatpush1.msra.mxu0 0.0
    %439 = vmatprep.subr.mxu0 0.0
    %440 = vmatpush1.msra.mxu0 0.0
    %441 = vmatprep.subr.mxu0 0.0
    %442 = vmatpush1.msra.mxu0 0.0
    %443 = vmatprep.mubr.f32.mxu0 0.0
    %v444 = vand.u32 %v50, 4294901760
    %445 = vmatmul.mubr.f32.gmra.mrb[0].mxu0 %v444
    %v446 = vpop.f32.mrb[0].mxu0
    %v447 = vadd.f32 %v367, %v446
    %v448 = vpop.f32.mrb[0].mxu0
    %449 = vdwg.mxu0
    %450 = vmatprep.subr.mxu0 0.0
    %v451 = vand.u32 %v45, 4294901760
    %452 = vmatpush1.msra.mxu0 %v451
    %453 = vmatprep.subr.mxu0 0.0
    %v454 = vand.u32 %v46, 4294901760
    %455 = vmatpush1.msra.mxu0 %v454
    %456 = vmatprep.subr.mxu0 0.0
    %v457 = vand.u32 %v47, 4294901760
    %458 = vmatpush1.msra.mxu0 %v457
    %459 = vmatprep.subr.mxu0 0.0
    %460 = vmatpush1.msra.mxu0 0.0
    %461 = vmatprep.subr.mxu0 0.0
    %462 = vmatpush1.msra.mxu0 0.0
    %463 = vmatprep.subr.mxu0 0.0
    %464 = vmatpush1.msra.mxu0 0.0
    %465 = vmatprep.subr.mxu0 0.0
    %466 = vmatpush1.msra.mxu0 0.0
    %467 = vmatprep.subr.mxu0 0.0
    %468 = vmatpush1.msra.mxu0 0.0
    %469 = vmatprep.subr.mxu0 0.0
    %470 = vmatpush1.msra.mxu0 0.0
    %471 = vmatprep.subr.mxu0 0.0
    %472 = vmatpush1.msra.mxu0 0.0
    %473 = vmatprep.subr.mxu0 0.0
    %474 = vmatpush1.msra.mxu0 0.0
    %475 = vmatprep.subr.mxu0 0.0
    %476 = vmatpush1.msra.mxu0 0.0
    %477 = vmatprep.subr.mxu0 0.0
    %478 = vmatpush1.msra.mxu0 0.0
    %479 = vmatprep.subr.mxu0 0.0
    %480 = vmatpush1.msra.mxu0 0.0
    %481 = vmatprep.subr.mxu0 0.0
    %482 = vmatpush1.msra.mxu0 0.0
    %483 = vmatprep.subr.mxu0 0.0
    %484 = vmatpush1.msra.mxu0 0.0
    %485 = vmatprep.subr.mxu0 0.0
    %486 = vmatpush1.msra.mxu0 0.0
    %487 = vmatprep.subr.mxu0 0.0
    %488 = vmatpush1.msra.mxu0 0.0
    %489 = vmatprep.subr.mxu0 0.0
    %490 = vmatpush1.msra.mxu0 0.0
    %491 = vmatprep.subr.mxu0 0.0
    %492 = vmatpush1.msra.mxu0 0.0
    %493 = vmatprep.subr.mxu0 0.0
    %494 = vmatpush1.msra.mxu0 0.0
    %495 = vmatprep.subr.mxu0 0.0
    %496 = vmatpush1.msra.mxu0 0.0
    %497 = vmatprep.subr.mxu0 0.0
    %498 = vmatpush1.msra.mxu0 0.0
    %499 = vmatprep.subr.mxu0 0.0
    %500 = vmatpush1.msra.mxu0 0.0
    %501 = vmatprep.subr.mxu0 0.0
    %502 = vmatpush1.msra.mxu0 0.0
    %503 = vmatprep.subr.mxu0 0.0
    %504 = vmatpush1.msra.mxu0 0.0
    %505 = vmatprep.subr.mxu0 0.0
    %506 = vmatpush1.msra.mxu0 0.0
    %507 = vmatprep.subr.mxu0 0.0
    %508 = vmatpush1.msra.mxu0 0.0
    %509 = vmatprep.subr.mxu0 0.0
    %510 = vmatpush1.msra.mxu0 0.0
    %511 = vmatprep.subr.mxu0 0.0
    %512 = vmatpush1.msra.mxu0 0.0
    %513 = vmatprep.subr.mxu0 0.0
    %514 = vmatpush1.msra.mxu0 0.0
    %515 = vmatprep.subr.mxu0 0.0
    %516 = vmatpush1.msra.mxu0 0.0
    %517 = vmatprep.mubr.f32.mxu0 0.0
    %v518 = vand.u32 %v50, 4294901760
    %519 = vmatmul.mubr.f32.gmra.mrb[0].mxu0 %v518
    %v520 = vpop.f32.mrb[0].mxu0
    %v521 = vadd.f32 %v447, %v520
    %v522 = vpop.f32.mrb[0].mxu0
    %523 = vdwg.mxu0
    %524 = vst [vmem:[#allocation5] sm:$0xff] %v521
    // Predicated region
    $region14: #{tpu_custom_call.1} parent=1 // pred_check
      _
    $region15: #{tpu_custom_call.1} parent=1 // pred_check_branch
      %526 = sbr.rel (0) target = $region17
    $region16: #{tpu_custom_call.1} parent=1 // pred_region
      %s528 = ssub.s32 128, 128
      %529 = vsyncadd [#allocation4], %s528
      %s531 = sshll.u32 [#allocation5], 4
      %s532 = int_to_ptr.vmem [resolvable:$true] %s531
      %534 = dma.vmem_to_hbm [thread:$0]  %s532, 128, %s2, [#allocation4]
    $region17: #{tpu_custom_call.1} parent=1 // pred_fallthru
      _
    // Predicated region
    $region18: #{tpu_custom_call.1} parent=1 // pred_check
      _
    $region19: #{tpu_custom_call.1} parent=1 // pred_check_branch
      %536 = sbr.rel (0) target = $region21
    $region20: #{tpu_custom_call.1} parent=1 // pred_region
      %537 = dma.done [#allocation4], 128
    $region21: #{tpu_custom_call.1} parent=1 // pred_fallthru
      _
    %538 = vsyncpa [#allocation3], 1
    %539 = vsyncpa [#allocation4], 1

</llo_original>
